<compile_context>
chip_gen: v7x
topology: tpu7x:2x2x1
jax: 0.10.0
libtpu: 0.0.40
codegen_flags: <defaults>
</compile_context>

<pallas_src>
import functools

import jax
import jax.numpy as jnp
from jax import lax
from jax.experimental import pallas as pl
from jax.experimental.pallas import tpu as pltpu

EPS = 1e-5          # nn.InstanceNorm2d default
NEG_SLOPE = 0.01    # nn.LeakyReLU default negative_slope
USE_BF16_MATMUL = False   # bf16 MXU path (v6e/v7x); keep False for 1e-4 f32 check


def residual_block_kernel(mask_ref, x_ref, w1_ref, g1_ref, b1_ref,
                          w2_ref, g2_ref, b2_ref, o_ref, pat_ref, *, h, w):
    """One grid step: bt samples, fully resident in VMEM.

    mask_ref : (9, HW) f32     precomputed 3x3 boundary masks (hoisted)
    x_ref    : (bt, Cp, HW)    input tile (Cp = C padded to sublane multiple)
    w*_ref   : (Cp, 9*Cp)      tap-major repacked conv weights
    g*/b*    : (Cp, 1)         InstanceNorm affine params
    o_ref    : (bt, Cp, HW)
    pat_ref  : (9*Cp, bt*HW)   im2col scratch (bf16 when the MXU path is bf16)
    """
    bt, cp, hw = x_ref.shape
    inv_hw = 1.0 / float(hw)
    pdt = pat_ref.dtype

    # Read weights / affine params once per grid step.  Their blocks use a
    # constant index_map, so Pallas does not re-DMA them across grid steps.
    w1m = w1_ref[...]
    w2m = w2_ref[...]
    g1, b1 = g1_ref[...], b1_ref[...]
    g2, b2 = g2_ref[...], b2_ref[...]

    taps = tuple((dh, dw) for dh in (-1, 0, 1) for dw in (-1, 0, 1))

    def build_patches(t, bi):
        # t: (Cp, HW) f32 for sample bi.  Writes the tap-major im2col columns
        #   pat[tap*Cp + ci, bi*HW + p] = t[ci, p + dh*W + dw]
        # zeroed outside the image (reproduces padding=1).  pltpu.roll uses
        # the XLU slot; the hoisted mask makes each tap one VPU multiply.
        for tap, (dh, dw) in enumerate(taps):
            shift = (-(dh * w + dw)) % hw
            s = pltpu.roll(t, shift, axis=1) if shift else t
            if dh == 0 and dw == 0:
                val = s                                   # center tap: all valid
            else:
                val = s * mask_ref[tap:tap + 1, :]        # (1, HW) broadcast
            pat_ref[tap * cp:(tap + 1) * cp, bi * hw:(bi + 1) * hw] = (
                val.astype(pdt))

    def inorm(y, gam, bet):
        # Biased (train-mode) per-channel stats over HW, one pass, f32.
        mean = jnp.sum(y, axis=1, keepdims=True) * inv_hw
        ex2 = jnp.sum(y * y, axis=1, keepdims=True) * inv_hw
        var = jnp.maximum(ex2 - mean * mean, 0.0)
        return (y - mean) * lax.rsqrt(var + EPS) * gam + bet

    x = x_ref[...].astype(jnp.float32)                    # (bt, Cp, HW)

    # ---- conv1: one fused (Cp, 9Cp) @ (9Cp, bt*HW) MXU matmul -------------
    for bi in range(bt):
        build_patches(x[bi], bi)
    y = jnp.dot(w1m, pat_ref[...], preferred_element_type=jnp.float32)

    # ---- IN1 + LeakyReLU per sample, then conv2 patches -------------------
    acts = []
    for bi in range(bt):
        yb = inorm(y[:, bi * hw:(bi + 1) * hw], g1, b1)
        acts.append(jnp.where(yb > 0, yb, NEG_SLOPE * yb))
    for bi in range(bt):
        build_patches(acts[bi], bi)
    y2 = jnp.dot(w2m, pat_ref[...], preferred_element_type=jnp.float32)

    # ---- IN2 + residual add (input tile still resident) --------------------
    for bi in range(bt):
        y2b = inorm(y2[:, bi * hw:(bi + 1) * hw], g2, b2)
        o_ref[bi] = (x[bi] + y2b).astype(o_ref.dtype)


def _vmem_capacity_bytes():
    try:
        info = pltpu.get_tpu_info()
        cap = getattr(info, "vmem_capacity_bytes", None)
        if cap:
            return int(cap)
    except Exception:
        pass
    return 64 * 1024 * 1024    # conservative: v7x per-TensorCore VMEM


def residual_block(x, w1, g1, b1, w2, g2, b2, *, use_bf16=USE_BF16_MATMUL):
    """x: (N, C, H, W) float32.  w*: (C, C, 3, 3).  g*, b*: (C,)."""
    n, c, h, w = x.shape
    hw = h * w
    f32 = jnp.float32
    mm_dtype = jnp.bfloat16 if use_bf16 else f32
    mm_bytes = 2 if use_bf16 else 4

    # Pad channels to the sublane multiple so every tap*Cp scratch store is an
    # aligned full-tile store (8 rows for f32, 16 for packed bf16).
    sub = 16 if use_bf16 else 8
    cp = ((c + sub - 1) // sub) * sub
    pad_c = cp - c

    # ---- size the batch tile (bt) and VMEM limit from actual tile sizes ----
    cap = _vmem_capacity_bytes()

    def step_bytes(d):
        io = 2 * 2 * d * cp * hw * 4                      # x + out, double-buffered
        wts = 2 * 2 * cp * 9 * cp * mm_bytes              # w1 + w2 blocks (x2 buffers)
        small = 2 * (9 * hw * 4 + 4 * cp * 4)             # masks + gamma/beta
        scratch = 9 * cp * d * hw * mm_bytes              # im2col scratch
        work = 4 * d * cp * hw * 4                        # y / y2 / roll temporaries
        return io + wts + small + scratch + work

    bt = 1
    for d in range(1, n + 1):
        if n % d:
            continue
        if n >= 2 and n // d < 2:
            continue                 # keep >= 2 parallel grid steps (v7x megacore)
        if step_bytes(d) <= cap // 2:
            bt = d

    vmem_limit = int(min(cap * 9 // 10,
                         max(2 * step_bytes(bt), 32 * 1024 * 1024)))

    # ---- lane-dense, channel-padded inputs ----------------------------------
    x_p = jnp.pad(x, ((0, 0), (0, pad_c), (0, 0), (0, 0))).reshape(n, cp, hw)

    def pack_w(wt):
        wp = jnp.pad(wt, ((0, pad_c), (0, pad_c), (0, 0), (0, 0)))
        # column index = (kh*3 + kw)*Cp + c_in, matching tap-major patch rows
        return jnp.transpose(wp, (0, 2, 3, 1)).reshape(cp, 9 * cp).astype(mm_dtype)

    def pack_gb(v):
        return jnp.pad(v, (0, pad_c)).reshape(cp, 1).astype(f32)

    w1m, w2m = pack_w(w1), pack_w(w2)
    g1c, b1c = pack_gb(g1), pack_gb(b1)
    g2c, b2c = pack_gb(g2), pack_gb(b2)

    # Hoisted 3x3 boundary masks: (9, HW), 1.0 where the tap stays inside HxW.
    pos = jnp.arange(hw, dtype=jnp.int32)
    row, col = pos // w, pos % w
    masks = []
    for dh in (-1, 0, 1):
        for dw in (-1, 0, 1):
            masks.append((row + dh >= 0) & (row + dh < h) &
                         (col + dw >= 0) & (col + dw < w))
    mask = jnp.stack(masks).astype(f32)                    # (9, HW)

    kernel = functools.partial(residual_block_kernel, h=h, w=w)

    out_p = pl.pallas_call(
        kernel,
        out_shape=jax.ShapeDtypeStruct((n, cp, hw), x.dtype),
        grid_spec=pltpu.PrefetchScalarGridSpec(
            num_scalar_prefetch=0,
            grid=(n // bt,),
            in_specs=[
                pl.BlockSpec((9, hw), lambda i: (0, 0)),           # boundary masks
                pl.BlockSpec((bt, cp, hw), lambda i: (i, 0, 0)),   # x tile
                pl.BlockSpec((cp, 9 * cp), lambda i: (0, 0)),      # w1
                pl.BlockSpec((cp, 1), lambda i: (0, 0)),           # gamma1
                pl.BlockSpec((cp, 1), lambda i: (0, 0)),           # beta1
                pl.BlockSpec((cp, 9 * cp), lambda i: (0, 0)),      # w2
                pl.BlockSpec((cp, 1), lambda i: (0, 0)),           # gamma2
                pl.BlockSpec((cp, 1), lambda i: (0, 0)),           # beta2
            ],
            out_specs=pl.BlockSpec((bt, cp, hw), lambda i: (i, 0, 0)),
            scratch_shapes=[pltpu.VMEM((9 * cp, bt * hw), mm_dtype)],  # im2col
        ),
        compiler_params=pltpu.CompilerParams(
            dimension_semantics=("parallel",),
            vmem_limit_bytes=vmem_limit),
    )(mask, x_p, w1m, g1c, b1c, w2m, g2c, b2c)

    return out_p[:, :c, :].reshape(n, c, h, w)


def ref_forward(x, w1, g1, b1, w2, g2, b2):
    """Pure-JAX reference mirroring the PyTorch forward."""
    def conv(inp, wgt):
        return lax.conv_general_dilated(
            inp, wgt, (1, 1), "SAME",
            dimension_numbers=("NCHW", "OIHW", "NCHW"))

    def inorm(y, g, b):
        mean = y.mean(axis=(2, 3), keepdims=True)
        var = ((y - mean) ** 2).mean(axis=(2, 3), keepdims=True)
        return ((y - mean) / jnp.sqrt(var + EPS)
                * g[None, :, None, None] + b[None, :, None, None])

    hid = conv(x, w1)
    hid = inorm(hid, g1, b1)
    hid = jnp.where(hid > 0, hid, NEG_SLOPE * hid)
    hid = conv(hid, w2)
    hid = inorm(hid, g2, b2)
    return x + hid


if __name__ == "__main__":
    N, C, H, W = 2, 4, 16, 16          # in_channels == out_channels (residual)
    key = jax.random.PRNGKey(0)
    ks = jax.random.split(key, 7)

    x = jax.random.normal(ks[0], (N, C, H, W), jnp.float32)
    # Conv2d(C, C, 3, 3, bias=False) weights — deterministic synthetic init.
    w1 = 0.1 * jax.random.normal(ks[1], (C, C, 3, 3), jnp.float32)
    w2 = 0.1 * jax.random.normal(ks[2], (C, C, 3, 3), jnp.float32)
    # InstanceNorm2d affine params (PyTorch init is gamma=1, beta=0; perturb
    # slightly so the affine path is actually exercised).
    g1 = 1.0 + 0.1 * jax.random.normal(ks[3], (C,), jnp.float32)
    b1 = 0.1 * jax.random.normal(ks[4], (C,), jnp.float32)
    g2 = 1.0 + 0.1 * jax.random.normal(ks[5], (C,), jnp.float32)
    b2 = 0.1 * jax.random.normal(ks[6], (C,), jnp.float32)

    out = residual_block(x, w1, g1, b1, w2, g2, b2)
    out = jax.block_until_ready(out)

    ref = ref_forward(x, w1, g1, b1, w2, g2, b2)
    err = float(jnp.max(jnp.abs(out - ref)))
    tol = 2e-2 if USE_BF16_MATMUL else 1e-4
    assert out.shape == (N, C, H, W) and out.dtype == jnp.float32
    assert jnp.allclose(out, ref, atol=tol, rtol=tol), f"max abs err {err}"

    print("KERNEL_OK")
</pallas_src>

<mosaic_0001>
module attributes {stable_mosaic.version = 11 : i64} {
  func.func @residual_block_kernel(%arg0: i32, %arg1: memref<9x256xf32, #tpu.memory_space<vmem>>, %arg2: memref<1x8x256xf32, #tpu.memory_space<vmem>>, %arg3: memref<8x72xf32, #tpu.memory_space<vmem>>, %arg4: memref<8x1xf32, #tpu.memory_space<vmem>>, %arg5: memref<8x1xf32, #tpu.memory_space<vmem>>, %arg6: memref<8x72xf32, #tpu.memory_space<vmem>>, %arg7: memref<8x1xf32, #tpu.memory_space<vmem>>, %arg8: memref<8x1xf32, #tpu.memory_space<vmem>>, %arg9: memref<1x8x256xf32, #tpu.memory_space<vmem>>, %arg10: memref<72x256xf32, #tpu.memory_space<vmem>>) attributes {dimension_semantics = [#tpu.dimension_semantics<parallel>], iteration_bounds = array<i64: 2>, scalar_prefetch = 0 : i64, scratch_operands = 1 : i64, tpu.core_type = #tpu.core_type<tc>, window_params = [{pipeline_mode = #tpu.pipeline_mode<synchronous>, transform_indices = @transform_0, window_bounds = array<i64: 9, 256>}, {transform_indices = @transform_1, window_bounds = array<i64: 1, 8, 256>}, {pipeline_mode = #tpu.pipeline_mode<synchronous>, transform_indices = @transform_2, window_bounds = array<i64: 8, 72>}, {pipeline_mode = #tpu.pipeline_mode<synchronous>, transform_indices = @transform_3, window_bounds = array<i64: 8, 1>}, {pipeline_mode = #tpu.pipeline_mode<synchronous>, transform_indices = @transform_4, window_bounds = array<i64: 8, 1>}, {pipeline_mode = #tpu.pipeline_mode<synchronous>, transform_indices = @transform_5, window_bounds = array<i64: 8, 72>}, {pipeline_mode = #tpu.pipeline_mode<synchronous>, transform_indices = @transform_6, window_bounds = array<i64: 8, 1>}, {pipeline_mode = #tpu.pipeline_mode<synchronous>, transform_indices = @transform_7, window_bounds = array<i64: 8, 1>}, {transform_indices = @transform_8, window_bounds = array<i64: 1, 8, 256>}]} {
    %c0 = arith.constant 0 : index
    %c0_0 = arith.constant 0 : index
    %0 = vector.load %arg3[%c0, %c0_0] : memref<8x72xf32, #tpu.memory_space<vmem>>, vector<8x72xf32>
    %c0_1 = arith.constant 0 : index
    %c0_2 = arith.constant 0 : index
    %1 = vector.load %arg6[%c0_1, %c0_2] : memref<8x72xf32, #tpu.memory_space<vmem>>, vector<8x72xf32>
    %c0_3 = arith.constant 0 : index
    %c0_4 = arith.constant 0 : index
    %2 = vector.load %arg4[%c0_3, %c0_4] : memref<8x1xf32, #tpu.memory_space<vmem>>, vector<8x1xf32>
    %c0_5 = arith.constant 0 : index
    %c0_6 = arith.constant 0 : index
    %3 = vector.load %arg5[%c0_5, %c0_6] : memref<8x1xf32, #tpu.memory_space<vmem>>, vector<8x1xf32>
    %c0_7 = arith.constant 0 : index
    %c0_8 = arith.constant 0 : index
    %4 = vector.load %arg7[%c0_7, %c0_8] : memref<8x1xf32, #tpu.memory_space<vmem>>, vector<8x1xf32>
    %c0_9 = arith.constant 0 : index
    %c0_10 = arith.constant 0 : index
    %5 = vector.load %arg8[%c0_9, %c0_10] : memref<8x1xf32, #tpu.memory_space<vmem>>, vector<8x1xf32>
    %c0_11 = arith.constant 0 : index
    %c0_12 = arith.constant 0 : index
    %c0_13 = arith.constant 0 : index
    %6 = vector.load %arg2[%c0_11, %c0_12, %c0_13] : memref<1x8x256xf32, #tpu.memory_space<vmem>>, vector<1x8x256xf32>
    %7 = vector.shape_cast %6 : vector<1x8x256xf32> to vector<8x256xf32>
    %c17_i32 = arith.constant 17 : i32
    %8 = tpu.dynamic_rotate %7 by %c17_i32 dim 1 : vector<8x256xf32>, i32 -> vector<8x256xf32>
    %c0_14 = arith.constant 0 : index
    %c0_15 = arith.constant 0 : index
    %9 = vector.load %arg1[%c0_14, %c0_15] : memref<9x256xf32, #tpu.memory_space<vmem>>, vector<1x256xf32>
    %10 = vector.broadcast %9 : vector<1x256xf32> to vector<8x256xf32>
    %11 = arith.mulf %8, %10 : vector<8x256xf32>
    %c0_16 = arith.constant 0 : index
    %c0_17 = arith.constant 0 : index
    %12 = vector.load %arg10[%c0_16, %c0_17] : memref<72x256xf32, #tpu.memory_space<vmem>>, vector<8x256xf32>
    tpu.vector_store %arg10[%c0_16, %c0_17], %11 {strides = array<i32>} : memref<72x256xf32, #tpu.memory_space<vmem>>, vector<8x256xf32>,
    %c16_i32 = arith.constant 16 : i32
    %13 = tpu.dynamic_rotate %7 by %c16_i32 dim 1 : vector<8x256xf32>, i32 -> vector<8x256xf32>
    %c1 = arith.constant 1 : index
    %c0_18 = arith.constant 0 : index
    %14 = vector.load %arg1[%c1, %c0_18] : memref<9x256xf32, #tpu.memory_space<vmem>>, vector<1x256xf32>
    %15 = vector.broadcast %14 : vector<1x256xf32> to vector<8x256xf32>
    %16 = arith.mulf %13, %15 : vector<8x256xf32>
    %c8 = arith.constant 8 : index
    %c0_19 = arith.constant 0 : index
    %17 = vector.load %arg10[%c8, %c0_19] : memref<72x256xf32, #tpu.memory_space<vmem>>, vector<8x256xf32>
    tpu.vector_store %arg10[%c8, %c0_19], %16 {strides = array<i32>} : memref<72x256xf32, #tpu.memory_space<vmem>>, vector<8x256xf32>,
    %c15_i32 = arith.constant 15 : i32
    %18 = tpu.dynamic_rotate %7 by %c15_i32 dim 1 : vector<8x256xf32>, i32 -> vector<8x256xf32>
    %c2 = arith.constant 2 : index
    %c0_20 = arith.constant 0 : index
    %19 = vector.load %arg1[%c2, %c0_20] : memref<9x256xf32, #tpu.memory_space<vmem>>, vector<1x256xf32>
    %20 = vector.broadcast %19 : vector<1x256xf32> to vector<8x256xf32>
    %21 = arith.mulf %18, %20 : vector<8x256xf32>
    %c16 = arith.constant 16 : index
    %c0_21 = arith.constant 0 : index
    %22 = vector.load %arg10[%c16, %c0_21] : memref<72x256xf32, #tpu.memory_space<vmem>>, vector<8x256xf32>
    tpu.vector_store %arg10[%c16, %c0_21], %21 {strides = array<i32>} : memref<72x256xf32, #tpu.memory_space<vmem>>, vector<8x256xf32>,
    %c1_i32 = arith.constant 1 : i32
    %23 = tpu.dynamic_rotate %7 by %c1_i32 dim 1 : vector<8x256xf32>, i32 -> vector<8x256xf32>
    %c3 = arith.constant 3 : index
    %c0_22 = arith.constant 0 : index
    %24 = vector.load %arg1[%c3, %c0_22] : memref<9x256xf32, #tpu.memory_space<vmem>>, vector<1x256xf32>
    %25 = vector.broadcast %24 : vector<1x256xf32> to vector<8x256xf32>
    %26 = arith.mulf %23, %25 : vector<8x256xf32>
    %c24 = arith.constant 24 : index
    %c0_23 = arith.constant 0 : index
    %27 = vector.load %arg10[%c24, %c0_23] : memref<72x256xf32, #tpu.memory_space<vmem>>, vector<8x256xf32>
    tpu.vector_store %arg10[%c24, %c0_23], %26 {strides = array<i32>} : memref<72x256xf32, #tpu.memory_space<vmem>>, vector<8x256xf32>,
    %c32 = arith.constant 32 : index
    %c0_24 = arith.constant 0 : index
    %28 = vector.load %arg10[%c32, %c0_24] : memref<72x256xf32, #tpu.memory_space<vmem>>, vector<8x256xf32>
    tpu.vector_store %arg10[%c32, %c0_24], %7 {strides = array<i32>} : memref<72x256xf32, #tpu.memory_space<vmem>>, vector<8x256xf32>,
    %c255_i32 = arith.constant 255 : i32
    %29 = tpu.dynamic_rotate %7 by %c255_i32 dim 1 : vector<8x256xf32>, i32 -> vector<8x256xf32>
    %c5 = arith.constant 5 : index
    %c0_25 = arith.constant 0 : index
    %30 = vector.load %arg1[%c5, %c0_25] : memref<9x256xf32, #tpu.memory_space<vmem>>, vector<1x256xf32>
    %31 = vector.broadcast %30 : vector<1x256xf32> to vector<8x256xf32>
    %32 = arith.mulf %29, %31 : vector<8x256xf32>
    %c40 = arith.constant 40 : index
    %c0_26 = arith.constant 0 : index
    %33 = vector.load %arg10[%c40, %c0_26] : memref<72x256xf32, #tpu.memory_space<vmem>>, vector<8x256xf32>
    tpu.vector_store %arg10[%c40, %c0_26], %32 {strides = array<i32>} : memref<72x256xf32, #tpu.memory_space<vmem>>, vector<8x256xf32>,
    %c241_i32 = arith.constant 241 : i32
    %34 = tpu.dynamic_rotate %7 by %c241_i32 dim 1 : vector<8x256xf32>, i32 -> vector<8x256xf32>
    %c6 = arith.constant 6 : index
    %c0_27 = arith.constant 0 : index
    %35 = vector.load %arg1[%c6, %c0_27] : memref<9x256xf32, #tpu.memory_space<vmem>>, vector<1x256xf32>
    %36 = vector.broadcast %35 : vector<1x256xf32> to vector<8x256xf32>
    %37 = arith.mulf %34, %36 : vector<8x256xf32>
    %c48 = arith.constant 48 : index
    %c0_28 = arith.constant 0 : index
    %38 = vector.load %arg10[%c48, %c0_28] : memref<72x256xf32, #tpu.memory_space<vmem>>, vector<8x256xf32>
    tpu.vector_store %arg10[%c48, %c0_28], %37 {strides = array<i32>} : memref<72x256xf32, #tpu.memory_space<vmem>>, vector<8x256xf32>,
    %c240_i32 = arith.constant 240 : i32
    %39 = tpu.dynamic_rotate %7 by %c240_i32 dim 1 : vector<8x256xf32>, i32 -> vector<8x256xf32>
    %c7 = arith.constant 7 : index
    %c0_29 = arith.constant 0 : index
    %40 = vector.load %arg1[%c7, %c0_29] : memref<9x256xf32, #tpu.memory_space<vmem>>, vector<1x256xf32>
    %41 = vector.broadcast %40 : vector<1x256xf32> to vector<8x256xf32>
    %42 = arith.mulf %39, %41 : vector<8x256xf32>
    %c56 = arith.constant 56 : index
    %c0_30 = arith.constant 0 : index
    %43 = vector.load %arg10[%c56, %c0_30] : memref<72x256xf32, #tpu.memory_space<vmem>>, vector<8x256xf32>
    tpu.vector_store %arg10[%c56, %c0_30], %42 {strides = array<i32>} : memref<72x256xf32, #tpu.memory_space<vmem>>, vector<8x256xf32>,
    %c239_i32 = arith.constant 239 : i32
    %44 = tpu.dynamic_rotate %7 by %c239_i32 dim 1 : vector<8x256xf32>, i32 -> vector<8x256xf32>
    %c8_31 = arith.constant 8 : index
    %c0_32 = arith.constant 0 : index
    %45 = vector.load %arg1[%c8_31, %c0_32] : memref<9x256xf32, #tpu.memory_space<vmem>>, vector<1x256xf32>
    %46 = vector.broadcast %45 : vector<1x256xf32> to vector<8x256xf32>
    %47 = arith.mulf %44, %46 : vector<8x256xf32>
    %c64 = arith.constant 64 : index
    %c0_33 = arith.constant 0 : index
    %48 = vector.load %arg10[%c64, %c0_33] : memref<72x256xf32, #tpu.memory_space<vmem>>, vector<8x256xf32>
    tpu.vector_store %arg10[%c64, %c0_33], %47 {strides = array<i32>} : memref<72x256xf32, #tpu.memory_space<vmem>>, vector<8x256xf32>,
    %c0_34 = arith.constant 0 : index
    %c0_35 = arith.constant 0 : index
    %49 = vector.load %arg10[%c0_34, %c0_35] : memref<72x256xf32, #tpu.memory_space<vmem>>, vector<72x256xf32>
    %cst = arith.constant dense<0.000000e+00> : vector<8x256xf32>
    %50 = tpu.matmul %0, %49, %cst {dimension_numbers = #tpu.dot_dimension_numbers<[1], [0], [0], [1], [0, 0, 1, 1], [], []>} : vector<8x72xf32>, vector<72x256xf32>, vector<8x256xf32> -> vector<8x256xf32>
    %cst_36 = arith.constant dense<0.000000e+00> : vector<8xf32>
    %51 = vector.multi_reduction <add>, %50, %cst_36 [1] : vector<8x256xf32> to vector<8xf32>
    %52 = vector.shape_cast %51 : vector<8xf32> to vector<8x1xf32>
    %cst_37 = arith.constant 3.906250e-03 : f32
    %53 = vector.broadcast %cst_37 : f32 to vector<8x1xf32>
    %54 = arith.mulf %52, %53 : vector<8x1xf32>
    %55 = arith.mulf %50, %50 : vector<8x256xf32>
    %cst_38 = arith.constant dense<0.000000e+00> : vector<8xf32>
    %56 = vector.multi_reduction <add>, %55, %cst_38 [1] : vector<8x256xf32> to vector<8xf32>
    %57 = vector.shape_cast %56 : vector<8xf32> to vector<8x1xf32>
    %cst_39 = arith.constant 3.906250e-03 : f32
    %58 = vector.broadcast %cst_39 : f32 to vector<8x1xf32>
    %59 = arith.mulf %57, %58 : vector<8x1xf32>
    %60 = arith.mulf %54, %54 : vector<8x1xf32>
    %61 = arith.subf %59, %60 : vector<8x1xf32>
    %cst_40 = arith.constant 0.000000e+00 : f32
    %62 = vector.broadcast %cst_40 : f32 to vector<8x1xf32>
    %63 = arith.maximumf %61, %62 : vector<8x1xf32>
    %64 = vector.broadcast %54 : vector<8x1xf32> to vector<8x256xf32>
    %65 = arith.subf %50, %64 : vector<8x256xf32>
    %cst_41 = arith.constant 9.99999974E-6 : f32
    %66 = vector.broadcast %cst_41 : f32 to vector<8x1xf32>
    %67 = arith.addf %63, %66 : vector<8x1xf32>
    %68 = math.rsqrt %67 : vector<8x1xf32>
    %69 = vector.broadcast %68 : vector<8x1xf32> to vector<8x256xf32>
    %70 = arith.mulf %65, %69 : vector<8x256xf32>
    %71 = vector.broadcast %2 : vector<8x1xf32> to vector<8x256xf32>
    %72 = arith.mulf %70, %71 : vector<8x256xf32>
    %73 = vector.broadcast %3 : vector<8x1xf32> to vector<8x256xf32>
    %74 = arith.addf %72, %73 : vector<8x256xf32>
    %cst_42 = arith.constant 0.000000e+00 : f32
    %75 = vector.broadcast %cst_42 : f32 to vector<8x256xf32>
    %76 = arith.cmpf ogt, %74, %75 : vector<8x256xf32>
    %cst_43 = arith.constant 0.00999999977 : f32
    %77 = vector.broadcast %cst_43 : f32 to vector<8x256xf32>
    %78 = arith.mulf %77, %74 : vector<8x256xf32>
    %79 = arith.select %76, %74, %78 : vector<8x256xi1>, vector<8x256xf32>
    %c17_i32_44 = arith.constant 17 : i32
    %80 = tpu.dynamic_rotate %79 by %c17_i32_44 dim 1 : vector<8x256xf32>, i32 -> vector<8x256xf32>
    %c0_45 = arith.constant 0 : index
    %c0_46 = arith.constant 0 : index
    %81 = vector.load %arg1[%c0_45, %c0_46] : memref<9x256xf32, #tpu.memory_space<vmem>>, vector<1x256xf32>
    %82 = vector.broadcast %81 : vector<1x256xf32> to vector<8x256xf32>
    %83 = arith.mulf %80, %82 : vector<8x256xf32>
    %c0_47 = arith.constant 0 : index
    %c0_48 = arith.constant 0 : index
    %84 = vector.load %arg10[%c0_47, %c0_48] : memref<72x256xf32, #tpu.memory_space<vmem>>, vector<8x256xf32>
    tpu.vector_store %arg10[%c0_47, %c0_48], %83 {strides = array<i32>} : memref<72x256xf32, #tpu.memory_space<vmem>>, vector<8x256xf32>,
    %c16_i32_49 = arith.constant 16 : i32
    %85 = tpu.dynamic_rotate %79 by %c16_i32_49 dim 1 : vector<8x256xf32>, i32 -> vector<8x256xf32>
    %c1_50 = arith.constant 1 : index
    %c0_51 = arith.constant 0 : index
    %86 = vector.load %arg1[%c1_50, %c0_51] : memref<9x256xf32, #tpu.memory_space<vmem>>, vector<1x256xf32>
    %87 = vector.broadcast %86 : vector<1x256xf32> to vector<8x256xf32>
    %88 = arith.mulf %85, %87 : vector<8x256xf32>
    %c8_52 = arith.constant 8 : index
    %c0_53 = arith.constant 0 : index
    %89 = vector.load %arg10[%c8_52, %c0_53] : memref<72x256xf32, #tpu.memory_space<vmem>>, vector<8x256xf32>
    tpu.vector_store %arg10[%c8_52, %c0_53], %88 {strides = array<i32>} : memref<72x256xf32, #tpu.memory_space<vmem>>, vector<8x256xf32>,
    %c15_i32_54 = arith.constant 15 : i32
    %90 = tpu.dynamic_rotate %79 by %c15_i32_54 dim 1 : vector<8x256xf32>, i32 -> vector<8x256xf32>
    %c2_55 = arith.constant 2 : index
    %c0_56 = arith.constant 0 : index
    %91 = vector.load %arg1[%c2_55, %c0_56] : memref<9x256xf32, #tpu.memory_space<vmem>>, vector<1x256xf32>
    %92 = vector.broadcast %91 : vector<1x256xf32> to vector<8x256xf32>
    %93 = arith.mulf %90, %92 : vector<8x256xf32>
    %c16_57 = arith.constant 16 : index
    %c0_58 = arith.constant 0 : index
    %94 = vector.load %arg10[%c16_57, %c0_58] : memref<72x256xf32, #tpu.memory_space<vmem>>, vector<8x256xf32>
    tpu.vector_store %arg10[%c16_57, %c0_58], %93 {strides = array<i32>} : memref<72x256xf32, #tpu.memory_space<vmem>>, vector<8x256xf32>,
    %c1_i32_59 = arith.constant 1 : i32
    %95 = tpu.dynamic_rotate %79 by %c1_i32_59 dim 1 : vector<8x256xf32>, i32 -> vector<8x256xf32>
    %c3_60 = arith.constant 3 : index
    %c0_61 = arith.constant 0 : index
    %96 = vector.load %arg1[%c3_60, %c0_61] : memref<9x256xf32, #tpu.memory_space<vmem>>, vector<1x256xf32>
    %97 = vector.broadcast %96 : vector<1x256xf32> to vector<8x256xf32>
    %98 = arith.mulf %95, %97 : vector<8x256xf32>
    %c24_62 = arith.constant 24 : index
    %c0_63 = arith.constant 0 : index
    %99 = vector.load %arg10[%c24_62, %c0_63] : memref<72x256xf32, #tpu.memory_space<vmem>>, vector<8x256xf32>
    tpu.vector_store %arg10[%c24_62, %c0_63], %98 {strides = array<i32>} : memref<72x256xf32, #tpu.memory_space<vmem>>, vector<8x256xf32>,
    %c32_64 = arith.constant 32 : index
    %c0_65 = arith.constant 0 : index
    %100 = vector.load %arg10[%c32_64, %c0_65] : memref<72x256xf32, #tpu.memory_space<vmem>>, vector<8x256xf32>
    tpu.vector_store %arg10[%c32_64, %c0_65], %79 {strides = array<i32>} : memref<72x256xf32, #tpu.memory_space<vmem>>, vector<8x256xf32>,
    %c255_i32_66 = arith.constant 255 : i32
    %101 = tpu.dynamic_rotate %79 by %c255_i32_66 dim 1 : vector<8x256xf32>, i32 -> vector<8x256xf32>
    %c5_67 = arith.constant 5 : index
    %c0_68 = arith.constant 0 : index
    %102 = vector.load %arg1[%c5_67, %c0_68] : memref<9x256xf32, #tpu.memory_space<vmem>>, vector<1x256xf32>
    %103 = vector.broadcast %102 : vector<1x256xf32> to vector<8x256xf32>
    %104 = arith.mulf %101, %103 : vector<8x256xf32>
    %c40_69 = arith.constant 40 : index
    %c0_70 = arith.constant 0 : index
    %105 = vector.load %arg10[%c40_69, %c0_70] : memref<72x256xf32, #tpu.memory_space<vmem>>, vector<8x256xf32>
    tpu.vector_store %arg10[%c40_69, %c0_70], %104 {strides = array<i32>} : memref<72x256xf32, #tpu.memory_space<vmem>>, vector<8x256xf32>,
    %c241_i32_71 = arith.constant 241 : i32
    %106 = tpu.dynamic_rotate %79 by %c241_i32_71 dim 1 : vector<8x256xf32>, i32 -> vector<8x256xf32>
    %c6_72 = arith.constant 6 : index
    %c0_73 = arith.constant 0 : index
    %107 = vector.load %arg1[%c6_72, %c0_73] : memref<9x256xf32, #tpu.memory_space<vmem>>, vector<1x256xf32>
    %108 = vector.broadcast %107 : vector<1x256xf32> to vector<8x256xf32>
    %109 = arith.mulf %106, %108 : vector<8x256xf32>
    %c48_74 = arith.constant 48 : index
    %c0_75 = arith.constant 0 : index
    %110 = vector.load %arg10[%c48_74, %c0_75] : memref<72x256xf32, #tpu.memory_space<vmem>>, vector<8x256xf32>
    tpu.vector_store %arg10[%c48_74, %c0_75], %109 {strides = array<i32>} : memref<72x256xf32, #tpu.memory_space<vmem>>, vector<8x256xf32>,
    %c240_i32_76 = arith.constant 240 : i32
    %111 = tpu.dynamic_rotate %79 by %c240_i32_76 dim 1 : vector<8x256xf32>, i32 -> vector<8x256xf32>
    %c7_77 = arith.constant 7 : index
    %c0_78 = arith.constant 0 : index
    %112 = vector.load %arg1[%c7_77, %c0_78] : memref<9x256xf32, #tpu.memory_space<vmem>>, vector<1x256xf32>
    %113 = vector.broadcast %112 : vector<1x256xf32> to vector<8x256xf32>
    %114 = arith.mulf %111, %113 : vector<8x256xf32>
    %c56_79 = arith.constant 56 : index
    %c0_80 = arith.constant 0 : index
    %115 = vector.load %arg10[%c56_79, %c0_80] : memref<72x256xf32, #tpu.memory_space<vmem>>, vector<8x256xf32>
    tpu.vector_store %arg10[%c56_79, %c0_80], %114 {strides = array<i32>} : memref<72x256xf32, #tpu.memory_space<vmem>>, vector<8x256xf32>,
    %c239_i32_81 = arith.constant 239 : i32
    %116 = tpu.dynamic_rotate %79 by %c239_i32_81 dim 1 : vector<8x256xf32>, i32 -> vector<8x256xf32>
    %c8_82 = arith.constant 8 : index
    %c0_83 = arith.constant 0 : index
    %117 = vector.load %arg1[%c8_82, %c0_83] : memref<9x256xf32, #tpu.memory_space<vmem>>, vector<1x256xf32>
    %118 = vector.broadcast %117 : vector<1x256xf32> to vector<8x256xf32>
    %119 = arith.mulf %116, %118 : vector<8x256xf32>
    %c64_84 = arith.constant 64 : index
    %c0_85 = arith.constant 0 : index
    %120 = vector.load %arg10[%c64_84, %c0_85] : memref<72x256xf32, #tpu.memory_space<vmem>>, vector<8x256xf32>
    tpu.vector_store %arg10[%c64_84, %c0_85], %119 {strides = array<i32>} : memref<72x256xf32, #tpu.memory_space<vmem>>, vector<8x256xf32>,
    %c0_86 = arith.constant 0 : index
    %c0_87 = arith.constant 0 : index
    %121 = vector.load %arg10[%c0_86, %c0_87] : memref<72x256xf32, #tpu.memory_space<vmem>>, vector<72x256xf32>
    %cst_88 = arith.constant dense<0.000000e+00> : vector<8x256xf32>
    %122 = tpu.matmul %1, %121, %cst_88 {dimension_numbers = #tpu.dot_dimension_numbers<[1], [0], [0], [1], [0, 0, 1, 1], [], []>} : vector<8x72xf32>, vector<72x256xf32>, vector<8x256xf32> -> vector<8x256xf32>
    %cst_89 = arith.constant dense<0.000000e+00> : vector<8xf32>
    %123 = vector.multi_reduction <add>, %122, %cst_89 [1] : vector<8x256xf32> to vector<8xf32>
    %124 = vector.shape_cast %123 : vector<8xf32> to vector<8x1xf32>
    %cst_90 = arith.constant 3.906250e-03 : f32
    %125 = vector.broadcast %cst_90 : f32 to vector<8x1xf32>
    %126 = arith.mulf %124, %125 : vector<8x1xf32>
    %127 = arith.mulf %122, %122 : vector<8x256xf32>
    %cst_91 = arith.constant dense<0.000000e+00> : vector<8xf32>
    %128 = vector.multi_reduction <add>, %127, %cst_91 [1] : vector<8x256xf32> to vector<8xf32>
    %129 = vector.shape_cast %128 : vector<8xf32> to vector<8x1xf32>
    %cst_92 = arith.constant 3.906250e-03 : f32
    %130 = vector.broadcast %cst_92 : f32 to vector<8x1xf32>
    %131 = arith.mulf %129, %130 : vector<8x1xf32>
    %132 = arith.mulf %126, %126 : vector<8x1xf32>
    %133 = arith.subf %131, %132 : vector<8x1xf32>
    %cst_93 = arith.constant 0.000000e+00 : f32
    %134 = vector.broadcast %cst_93 : f32 to vector<8x1xf32>
    %135 = arith.maximumf %133, %134 : vector<8x1xf32>
    %136 = vector.broadcast %126 : vector<8x1xf32> to vector<8x256xf32>
    %137 = arith.subf %122, %136 : vector<8x256xf32>
    %cst_94 = arith.constant 9.99999974E-6 : f32
    %138 = vector.broadcast %cst_94 : f32 to vector<8x1xf32>
    %139 = arith.addf %135, %138 : vector<8x1xf32>
    %140 = math.rsqrt %139 : vector<8x1xf32>
    %141 = vector.broadcast %140 : vector<8x1xf32> to vector<8x256xf32>
    %142 = arith.mulf %137, %141 : vector<8x256xf32>
    %143 = vector.broadcast %4 : vector<8x1xf32> to vector<8x256xf32>
    %144 = arith.mulf %142, %143 : vector<8x256xf32>
    %145 = vector.broadcast %5 : vector<8x1xf32> to vector<8x256xf32>
    %146 = arith.addf %144, %145 : vector<8x256xf32>
    %147 = vector.shape_cast %6 : vector<1x8x256xf32> to vector<8x256xf32>
    %148 = arith.addf %147, %146 : vector<8x256xf32>
    %c0_95 = arith.constant 0 : index
    %c0_96 = arith.constant 0 : index
    %c0_97 = arith.constant 0 : index
    %149 = vector.load %arg9[%c0_95, %c0_96, %c0_97] : memref<1x8x256xf32, #tpu.memory_space<vmem>>, vector<1x8x256xf32>
    %150 = vector.shape_cast %149 : vector<1x8x256xf32> to vector<8x256xf32>
    %151 = vector.shape_cast %148 : vector<8x256xf32> to vector<1x8x256xf32>
    tpu.vector_store %arg9[%c0_95, %c0_96, %c0_97], %151 {strides = array<i32>} : memref<1x8x256xf32, #tpu.memory_space<vmem>>, vector<1x8x256xf32>,
    return
  }
  func.func @transform_0(%arg0: i32) -> (i32, i32) {
    %c0_i32 = arith.constant 0 : i32
    %c0_i32_0 = arith.constant 0 : i32
    %c0_i32_1 = arith.constant 0 : i32
    return %c0_i32, %c0_i32_0 : i32, i32
  }
  func.func @transform_1(%arg0: i32) -> (i32, i32, i32) {
    %c0_i32 = arith.constant 0 : i32
    %c0_i32_0 = arith.constant 0 : i32
    %c0_i32_1 = arith.constant 0 : i32
    return %arg0, %c0_i32, %c0_i32_0 : i32, i32, i32
  }
  func.func @transform_2(%arg0: i32) -> (i32, i32) {
    %c0_i32 = arith.constant 0 : i32
    %c0_i32_0 = arith.constant 0 : i32
    %c0_i32_1 = arith.constant 0 : i32
    return %c0_i32, %c0_i32_0 : i32, i32
  }
  func.func @transform_3(%arg0: i32) -> (i32, i32) {
    %c0_i32 = arith.constant 0 : i32
    %c0_i32_0 = arith.constant 0 : i32
    %c0_i32_1 = arith.constant 0 : i32
    return %c0_i32, %c0_i32_0 : i32, i32
  }
  func.func @transform_4(%arg0: i32) -> (i32, i32) {
    %c0_i32 = arith.constant 0 : i32
    %c0_i32_0 = arith.constant 0 : i32
    %c0_i32_1 = arith.constant 0 : i32
    return %c0_i32, %c0_i32_0 : i32, i32
  }
  func.func @transform_5(%arg0: i32) -> (i32, i32) {
    %c0_i32 = arith.constant 0 : i32
    %c0_i32_0 = arith.constant 0 : i32
    %c0_i32_1 = arith.constant 0 : i32
    return %c0_i32, %c0_i32_0 : i32, i32
  }
  func.func @transform_6(%arg0: i32) -> (i32, i32) {
    %c0_i32 = arith.constant 0 : i32
    %c0_i32_0 = arith.constant 0 : i32
    %c0_i32_1 = arith.constant 0 : i32
    return %c0_i32, %c0_i32_0 : i32, i32
  }
  func.func @transform_7(%arg0: i32) -> (i32, i32) {
    %c0_i32 = arith.constant 0 : i32
    %c0_i32_0 = arith.constant 0 : i32
    %c0_i32_1 = arith.constant 0 : i32
    return %c0_i32, %c0_i32_0 : i32, i32
  }
  func.func @transform_8(%arg0: i32) -> (i32, i32, i32) {
    %c0_i32 = arith.constant 0 : i32
    %c0_i32_0 = arith.constant 0 : i32
    %c0_i32_1 = arith.constant 0 : i32
    return %arg0, %c0_i32, %c0_i32_0 : i32, i32, i32
  }
}

</mosaic_0001>

<llo_original>
// kernel: tpu_custom_call.1
$region0: #{tpu_custom_call.1}
  #allocation0 [shape = 'u32[]', space=smem, size = 0x4, offset = 0x4, fixed_abs, tag = 'smem constant byte address 0x4 - core index']
  #allocation1 [shape = 'u32[144,128]{1,0:T(1,128)}', space=vmem, size = 0x12000, scoped, tag = 'internal scratch']
  #allocation2 [shape = 'f32[72,256]{1,0:T(8,128)}', space=vmem, size = 0x12000, scoped, tag = 'scratch operand']
  %s0 = inlined_call_operand.vmem [shape: f32[9,256], index: 0, kind: input, shape index: {}]
  %s1 = inlined_call_operand.hbm [shape: f32[2,8,256], index: 1, kind: input, shape index: {}]
  %s2 = inlined_call_operand.vmem [shape: f32[8,72], index: 2, kind: input, shape index: {}]
  %s3 = inlined_call_operand.vmem [shape: f32[8,1], index: 3, kind: input, shape index: {}]
  %s4 = inlined_call_operand.vmem [shape: f32[8,1], index: 4, kind: input, shape index: {}]
  %s5 = inlined_call_operand.vmem [shape: f32[8,72], index: 5, kind: input, shape index: {}]
  %s6 = inlined_call_operand.vmem [shape: f32[8,1], index: 6, kind: input, shape index: {}]
  %s7 = inlined_call_operand.vmem [shape: f32[8,1], index: 7, kind: input, shape index: {}]
  %s8 = inlined_call_operand.hbm [shape: f32[2,8,256], index: 8, kind: output, shape index: {}]
  %s9 = sld [smem:[#allocation0]]
  $region69: #{tpu_custom_call.1} parent=0
    _
  %s11 = ssub.s32 1, %s9
  %s12 = scalar_select 0, %s11, %s9
  $region1: #{tpu_custom_call.1} parent=0
    #allocation3 [shape = 'u8[16384]{0}', space=vmem, size = 0x4000, scoped, tag = 'input window, operand 1']
    #allocation4 [shape = 's32[2]{0}', space=sflag, size = 0x8, scoped, tag = 'scoped memory for tpu_custom_call.1']
    #allocation5 [shape = 's32[2]{0}', space=sflag, size = 0x8, scoped, tag = 'scoped memory for tpu_custom_call.1']
    #allocation6 [shape = 'u8[16384]{0}', space=vmem, size = 0x4000, scoped, tag = 'output window, operand 0']
    %13 = vsyncpa [#allocation4], 0
    %s14 = scalar_lea.sflag [#allocation4], 1
    %15 = vsyncpa %s14, 0
    %16 = vsyncpa [#allocation5], 0
    %s17 = scalar_lea.sflag [#allocation5], 1
    %18 = vsyncpa %s17, 0
    loop: start=0, step=1, limit=4
    $region2: #{tpu_custom_call.1} parent=1 // loop_pre_header
      _
    $region3: #{tpu_custom_call.1} parent=1 // loop_header
      %s20 = sphi 0, %s24
      %p21 = scmp.ge.s32.totalorder %s20, 4
      %s28 = sphi 0, %s28
      %s30 = sphi 0, %s28
      %s31 = sphi 0, %s30
      %s45 = sphi 0, %s31
      %s51 = sphi 0, %s53
      %s54 = sphi 0, %s51
      %s55 = sphi 0, %s54
      %s71 = sphi 0, %s55
      %s75 = sphi 0, %s75
      %s77 = sphi 0, %s75
      %s78 = sphi 0, %s77
      %s92 = sphi 0, %s78
      %s96 = sphi 0, %s96
      %s98 = sphi 0, %s96
      %s99 = sphi 0, %s98
      %s113 = sphi 0, %s99
      %s117 = sphi 0, %s117
      %s119 = sphi 0, %s117
      %s120 = sphi 0, %s119
      %s134 = sphi 0, %s120
      %s138 = sphi 0, %s138
      %s140 = sphi 0, %s138
      %s141 = sphi 0, %s140
      %s155 = sphi 0, %s141
      %s159 = sphi 0, %s159
      %s161 = sphi 0, %s159
      %s162 = sphi 0, %s161
      %s176 = sphi 0, %s162
      %s180 = sphi 0, %s180
      %s182 = sphi 0, %s180
      %s183 = sphi 0, %s182
      %s197 = sphi 0, %s183
      %s203 = sphi 0, %s205
      %s206 = sphi 0, %s203
      %s207 = sphi 0, %s206
      %s223 = sphi 0, %s207
    $region4: #{tpu_custom_call.1} parent=1 // loop_header_branch
      %23 = sbr.rel (%p21) target = $region8
    $region5: #{tpu_custom_call.1} parent=1 // loop_body
      %s25 = ssub.s32 %s20, 1
      %s26 = ssub.s32 %s20, 2
      %s27 = sadd.s32 %s20, 1
      %s29 = sadd.s32 %s28, 1
      %p32 = scmp.eq.s32.totalorder %s20, 1
      %p33 = scmp.ne.s32.totalorder %s28, %s30
      %p34 = scmp.eq.s32.totalorder %s20, 0
      %p35 = por %p33, %p34
      %p36 = scmp.ne.s32.totalorder %s28, %s30
      %p37 = scmp.eq.s32.totalorder %s25, 1
      %p38 = por %p36, %p37
      %p39 = scmp.ne.s32.totalorder %s30, %s31
      %p40 = scmp.eq.s32.totalorder %s25, 0
      %p41 = por %p39, %p40
      %p42 = scmp.ne.s32.totalorder %s30, %s31
      %p43 = scmp.eq.s32.totalorder %s26, 1
      %p44 = por %p42, %p43
      %p46 = scmp.ne.s32.totalorder %s31, %s45
      %p47 = scmp.eq.s32.totalorder %s26, 0
      %p48 = por %p46, %p47
      %s49 = ssub.s32 %s20, %s27
      %p50 = scmp.eq.s32.totalorder %s49, 0
      %s52 = sadd.s32 %s51, 1
      %s53 = scalar_select %p50, %s51, %s52
      %p56 = pneg %p50
      %p57 = scmp.eq.s32.totalorder %s20, 1
      %p58 = por %p56, %p57
      %p59 = scmp.ne.s32.totalorder %s51, %s54
      %p60 = scmp.eq.s32.totalorder %s20, 0
      %p61 = por %p59, %p60
      %p62 = scmp.ne.s32.totalorder %s51, %s54
      %p63 = scmp.eq.s32.totalorder %s25, 1
      %p64 = por %p62, %p63
      %p65 = scmp.ne.s32.totalorder %s54, %s55
      %p66 = scmp.eq.s32.totalorder %s25, 0
      %p67 = por %p65, %p66
      %p68 = scmp.ne.s32.totalorder %s54, %s55
      %p69 = scmp.eq.s32.totalorder %s26, 1
      %p70 = por %p68, %p69
      %p72 = scmp.ne.s32.totalorder %s55, %s71
      %p73 = scmp.eq.s32.totalorder %s26, 0
      %p74 = por %p72, %p73
      %s76 = sadd.s32 %s75, 1
      %p79 = scmp.eq.s32.totalorder %s20, 1
      %p80 = scmp.ne.s32.totalorder %s75, %s77
      %p81 = scmp.eq.s32.totalorder %s20, 0
      %p82 = por %p80, %p81
      %p83 = scmp.ne.s32.totalorder %s75, %s77
      %p84 = scmp.eq.s32.totalorder %s25, 1
      %p85 = por %p83, %p84
      %p86 = scmp.ne.s32.totalorder %s77, %s78
      %p87 = scmp.eq.s32.totalorder %s25, 0
      %p88 = por %p86, %p87
      %p89 = scmp.ne.s32.totalorder %s77, %s78
      %p90 = scmp.eq.s32.totalorder %s26, 1
      %p91 = por %p89, %p90
      %p93 = scmp.ne.s32.totalorder %s78, %s92
      %p94 = scmp.eq.s32.totalorder %s26, 0
      %p95 = por %p93, %p94
      %s97 = sadd.s32 %s96, 1
      %p100 = scmp.eq.s32.totalorder %s20, 1
      %p101 = scmp.ne.s32.totalorder %s96, %s98
      %p102 = scmp.eq.s32.totalorder %s20, 0
      %p103 = por %p101, %p102
      %p104 = scmp.ne.s32.totalorder %s96, %s98
      %p105 = scmp.eq.s32.totalorder %s25, 1
      %p106 = por %p104, %p105
      %p107 = scmp.ne.s32.totalorder %s98, %s99
      %p108 = scmp.eq.s32.totalorder %s25, 0
      %p109 = por %p107, %p108
      %p110 = scmp.ne.s32.totalorder %s98, %s99
      %p111 = scmp.eq.s32.totalorder %s26, 1
      %p112 = por %p110, %p111
      %p114 = scmp.ne.s32.totalorder %s99, %s113
      %p115 = scmp.eq.s32.totalorder %s26, 0
      %p116 = por %p114, %p115
      %s118 = sadd.s32 %s117, 1
      %p121 = scmp.eq.s32.totalorder %s20, 1
      %p122 = scmp.ne.s32.totalorder %s117, %s119
      %p123 = scmp.eq.s32.totalorder %s20, 0
      %p124 = por %p122, %p123
      %p125 = scmp.ne.s32.totalorder %s117, %s119
      %p126 = scmp.eq.s32.totalorder %s25, 1
      %p127 = por %p125, %p126
      %p128 = scmp.ne.s32.totalorder %s119, %s120
      %p129 = scmp.eq.s32.totalorder %s25, 0
      %p130 = por %p128, %p129
      %p131 = scmp.ne.s32.totalorder %s119, %s120
      %p132 = scmp.eq.s32.totalorder %s26, 1
      %p133 = por %p131, %p132
      %p135 = scmp.ne.s32.totalorder %s120, %s134
      %p136 = scmp.eq.s32.totalorder %s26, 0
      %p137 = por %p135, %p136
      %s139 = sadd.s32 %s138, 1
      %p142 = scmp.eq.s32.totalorder %s20, 1
      %p143 = scmp.ne.s32.totalorder %s138, %s140
      %p144 = scmp.eq.s32.totalorder %s20, 0
      %p145 = por %p143, %p144
      %p146 = scmp.ne.s32.totalorder %s138, %s140
      %p147 = scmp.eq.s32.totalorder %s25, 1
      %p148 = por %p146, %p147
      %p149 = scmp.ne.s32.totalorder %s140, %s141
      %p150 = scmp.eq.s32.totalorder %s25, 0
      %p151 = por %p149, %p150
      %p152 = scmp.ne.s32.totalorder %s140, %s141
      %p153 = scmp.eq.s32.totalorder %s26, 1
      %p154 = por %p152, %p153
      %p156 = scmp.ne.s32.totalorder %s141, %s155
      %p157 = scmp.eq.s32.totalorder %s26, 0
      %p158 = por %p156, %p157
      %s160 = sadd.s32 %s159, 1
      %p163 = scmp.eq.s32.totalorder %s20, 1
      %p164 = scmp.ne.s32.totalorder %s159, %s161
      %p165 = scmp.eq.s32.totalorder %s20, 0
      %p166 = por %p164, %p165
      %p167 = scmp.ne.s32.totalorder %s159, %s161
      %p168 = scmp.eq.s32.totalorder %s25, 1
      %p169 = por %p167, %p168
      %p170 = scmp.ne.s32.totalorder %s161, %s162
      %p171 = scmp.eq.s32.totalorder %s25, 0
      %p172 = por %p170, %p171
      %p173 = scmp.ne.s32.totalorder %s161, %s162
      %p174 = scmp.eq.s32.totalorder %s26, 1
      %p175 = por %p173, %p174
      %p177 = scmp.ne.s32.totalorder %s162, %s176
      %p178 = scmp.eq.s32.totalorder %s26, 0
      %p179 = por %p177, %p178
      %s181 = sadd.s32 %s180, 1
      %p184 = scmp.eq.s32.totalorder %s20, 1
      %p185 = scmp.ne.s32.totalorder %s180, %s182
      %p186 = scmp.eq.s32.totalorder %s20, 0
      %p187 = por %p185, %p186
      %p188 = scmp.ne.s32.totalorder %s180, %s182
      %p189 = scmp.eq.s32.totalorder %s25, 1
      %p190 = por %p188, %p189
      %p191 = scmp.ne.s32.totalorder %s182, %s183
      %p192 = scmp.eq.s32.totalorder %s25, 0
      %p193 = por %p191, %p192
      %p194 = scmp.ne.s32.totalorder %s182, %s183
      %p195 = scmp.eq.s32.totalorder %s26, 1
      %p196 = por %p194, %p195
      %p198 = scmp.ne.s32.totalorder %s183, %s197
      %p199 = scmp.eq.s32.totalorder %s26, 0
      %p200 = por %p198, %p199
      %s201 = ssub.s32 %s20, %s27
      %p202 = scmp.eq.s32.totalorder %s201, 0
      %s204 = sadd.s32 %s203, 1
      %s205 = scalar_select %p202, %s203, %s204
      %p208 = pneg %p202
      %p209 = scmp.eq.s32.totalorder %s20, 1
      %p210 = por %p208, %p209
      %p211 = scmp.ne.s32.totalorder %s203, %s206
      %p212 = scmp.eq.s32.totalorder %s20, 0
      %p213 = por %p211, %p212
      %p214 = scmp.ne.s32.totalorder %s203, %s206
      %p215 = scmp.eq.s32.totalorder %s25, 1
      %p216 = por %p214, %p215
      %p217 = scmp.ne.s32.totalorder %s206, %s207
      %p218 = scmp.eq.s32.totalorder %s25, 0
      %p219 = por %p217, %p218
      %p220 = scmp.ne.s32.totalorder %s206, %s207
      %p221 = scmp.eq.s32.totalorder %s26, 1
      %p222 = por %p220, %p221
      %p224 = scmp.ne.s32.totalorder %s207, %s223
      %p225 = scmp.eq.s32.totalorder %s26, 0
      %p226 = por %p224, %p225
      %p227 = scmp.le.s32.totalorder 1, %s20
      %p228 = scmp.lt.s32.totalorder %s20, 3
      %p229 = pnand %p227, %p228
      %p230 = pneg %p229
      // Predicated region
      $region9: #{tpu_custom_call.1} parent=5 // pred_check
        _
      $region10: #{tpu_custom_call.1} parent=5 // pred_check_branch
        %232 = sbr.rel (%p229) target = $region12
      $region11: #{tpu_custom_call.1} parent=5 // pred_region
        %s233 = ssub.s32 %s20, 1
        // Predicated region
        $region13: #{tpu_custom_call.1} parent=11 // pred_check
          %p234 = pneg %p41
        $region14: #{tpu_custom_call.1} parent=11 // pred_check_branch
          %236 = sbr.rel (%p234) target = $region16
        $region15: #{tpu_custom_call.1} parent=11 // pred_region
          _
        $region16: #{tpu_custom_call.1} parent=11 // pred_fallthru
          _
        // Predicated region
        $region17: #{tpu_custom_call.1} parent=11 // pred_check
          %p237 = pneg %p88
        $region18: #{tpu_custom_call.1} parent=11 // pred_check_branch
          %239 = sbr.rel (%p237) target = $region20
        $region19: #{tpu_custom_call.1} parent=11 // pred_region
          _
        $region20: #{tpu_custom_call.1} parent=11 // pred_fallthru
          _
        // Predicated region
        $region21: #{tpu_custom_call.1} parent=11 // pred_check
          %p240 = pneg %p109
        $region22: #{tpu_custom_call.1} parent=11 // pred_check_branch
          %242 = sbr.rel (%p240) target = $region24
        $region23: #{tpu_custom_call.1} parent=11 // pred_region
          _
        $region24: #{tpu_custom_call.1} parent=11 // pred_fallthru
          _
        // Predicated region
        $region25: #{tpu_custom_call.1} parent=11 // pred_check
          %p243 = pneg %p130
        $region26: #{tpu_custom_call.1} parent=11 // pred_check_branch
          %245 = sbr.rel (%p243) target = $region28
        $region27: #{tpu_custom_call.1} parent=11 // pred_region
          _
        $region28: #{tpu_custom_call.1} parent=11 // pred_fallthru
          _
        // Predicated region
        $region29: #{tpu_custom_call.1} parent=11 // pred_check
          %p246 = pneg %p151
        $region30: #{tpu_custom_call.1} parent=11 // pred_check_branch
          %248 = sbr.rel (%p246) target = $region32
        $region31: #{tpu_custom_call.1} parent=11 // pred_region
          _
        $region32: #{tpu_custom_call.1} parent=11 // pred_fallthru
          _
        // Predicated region
        $region33: #{tpu_custom_call.1} parent=11 // pred_check
          %p249 = pneg %p172
        $region34: #{tpu_custom_call.1} parent=11 // pred_check_branch
          %251 = sbr.rel (%p249) target = $region36
        $region35: #{tpu_custom_call.1} parent=11 // pred_region
          _
        $region36: #{tpu_custom_call.1} parent=11 // pred_fallthru
          _
        // Predicated region
        $region37: #{tpu_custom_call.1} parent=11 // pred_check
          %p252 = pneg %p193
        $region38: #{tpu_custom_call.1} parent=11 // pred_check_branch
          %254 = sbr.rel (%p252) target = $region40
        $region39: #{tpu_custom_call.1} parent=11 // pred_region
          _
        $region40: #{tpu_custom_call.1} parent=11 // pred_fallthru
          _
      $region12: #{tpu_custom_call.1} parent=5 // pred_fallthru
        _
      %p255 = scmp.lt.s32.totalorder %s20, 2
      // Predicated region
      $region41: #{tpu_custom_call.1} parent=5 // pred_check
        %p256 = pneg %p255
      $region42: #{tpu_custom_call.1} parent=5 // pred_check_branch
        %258 = sbr.rel (%p256) target = $region44
      $region43: #{tpu_custom_call.1} parent=5 // pred_region
        // Predicated region
        $region45: #{tpu_custom_call.1} parent=43 // pred_check
          %p259 = pneg %p61
        $region46: #{tpu_custom_call.1} parent=43 // pred_check_branch
          %261 = sbr.rel (%p259) target = $region48
        $region47: #{tpu_custom_call.1} parent=43 // pred_region
          %s262 = sand.u32 %s51, 1
          %s263 = scalar_lea.sflag [#allocation4], %s262
          %s264 = sand.u32 %s51, 1
          %s265 = smul.addr %s264, 16
          %s266 = scalar_lea.vmem [#allocation3], %s265
          %s268 = ssub.s32 256, 256
          %269 = vsyncadd %s263, %s268
          %s270 = smul.addr %s20, 2
          %s271 = smul.addr %s270, 128
          %s272 = scalar_lea.hbm %s1, %s271
          %s274 = sshll.u32 %s266, 4
          %s275 = int_to_ptr.vmem [resolvable:$true] %s274
          %277 = dma.hbm_to_vmem [thread:$0]  %s272, 256, %s275, %s263
        $region48: #{tpu_custom_call.1} parent=43 // pred_fallthru
          _
      $region44: #{tpu_custom_call.1} parent=5 // pred_fallthru
        _
      %p278 = scmp.le.s32.totalorder 1, %s20
      %p279 = scmp.lt.s32.totalorder %s20, 3
      %p280 = pnand %p278, %p279
      %p281 = pneg %p280
      // Predicated region
      $region49: #{tpu_custom_call.1} parent=5 // pred_check
        _
      $region50: #{tpu_custom_call.1} parent=5 // pred_check_branch
        %283 = sbr.rel (%p280) target = $region52
      $region51: #{tpu_custom_call.1} parent=5 // pred_region
        %s284 = ssub.s32 %s20, 1
        %s285 = sand.u32 %s54, 1
        %s286 = scalar_lea.sflag [#allocation4], %s285
        %s287 = sand.u32 %s54, 1
        %s288 = smul.addr %s287, 16
        %s289 = scalar_lea.vmem [#allocation3], %s288
        // Predicated region
        $region53: #{tpu_custom_call.1} parent=51 // pred_check
          %p290 = pneg %p67
        $region54: #{tpu_custom_call.1} parent=51 // pred_check_branch
          %292 = sbr.rel (%p290) target = $region56
        $region55: #{tpu_custom_call.1} parent=51 // pred_region
          %293 = dma.done %s286, 256
        $region56: #{tpu_custom_call.1} parent=51 // pred_fallthru
          _
        %p294 = pneg %p41
        %p295 = pneg %p38
        %s296 = sand.u32 %s54, 1
        %s297 = scalar_lea.sflag [#allocation4], %s296
        %s298 = sand.u32 %s54, 1
        %s299 = smul.addr %s298, 16
        %s300 = scalar_lea.vmem [#allocation3], %s299
        %p301 = pneg %p67
        %p302 = pneg %p64
        %p303 = pneg %p88
        %p304 = pneg %p85
        %p305 = pneg %p109
        %p306 = pneg %p106
        %p307 = pneg %p130
        %p308 = pneg %p127
        %p309 = pneg %p151
        %p310 = pneg %p148
        %p311 = pneg %p172
        %p312 = pneg %p169
        %p313 = pneg %p193
        %p314 = pneg %p190
        %p315 = pneg %p219
        %p316 = pneg %p216
        %s317 = sand.u32 %s206, 1
        %s318 = scalar_lea.sflag [#allocation5], %s317
        %s319 = sand.u32 %s206, 1
        %s320 = smul.addr %s319, 16
        %s321 = scalar_lea.vmem [#allocation6], %s320
        %v322 = vld [vmem:[%s2] sm:$0xff]
        %v323 = vld [vmem:[%s5] sm:$0xff]
        %v324 = vld [vmem:[%s3] sm:$0xff]
        %v325 = vld [vmem:[%s4] sm:$0xff]
        %v326 = vld [vmem:[%s6] sm:$0xff]
        %v327 = vld [vmem:[%s7] sm:$0xff]
        %v328 = vld [vmem:[%s289] sm:$0xff]
        %v329 = vld [vmem:[%s289 + $0x8] sm:$0xff]
        %330 = vrot.lane.b32.xlu0 %v328, 17
        %v331 = vpop.permute.xlu0 %330
        %332 = vrot.lane.b32.xlu0 %v329, 17
        %v333 = vpop.permute.xlu0 %332
        %v334 = vlaneseq
        %v335 = vand.u32 %v334, 127
        %vm336 = vcmp.lt.s32.totalorder %v335, 17
        %v337 = vsel %vm336, %v331, %v333
        %v338 = vsel %vm336, %v333, %v331
        %v339 = vld [vmem:[%s0] ss:$8 sm:$0x3]
        %v341 = vlaneseq
        %v342 = vshrl.u32 %v341, 7
        %v343 = vsub.s32 0, %v342
        %v344 = vrot.slane %v339, %v343
        %v345 = vlaneseq
        %v346 = vshrl.u32 %v345, 7
        %v347 = vsub.s32 1, %v346
        %v348 = vrot.slane %v339, %v347
        %v351 = vmul.f32 %v338, %v344
        %v352 = vmul.f32 %v337, %v348
        %353 = vst [vmem:[#allocation2] sm:$0xff] %v351
        %354 = vst [vmem:[#allocation2 + $0x8] sm:$0xff] %v352
        %355 = vrot.lane.b32.xlu0 %v328, 16
        %v356 = vpop.permute.xlu0 %355
        %357 = vrot.lane.b32.xlu0 %v329, 16
        %v358 = vpop.permute.xlu0 %357
        %vm359 = vcmp.lt.s32.totalorder %v335, 16
        %v360 = vsel %vm359, %v356, %v358
        %v361 = vsel %vm359, %v358, %v356
        %s362 = scalar_lea.vmem %s0, 1
        %v363 = vld [vmem:[%s362] ss:$8 sm:$0x3]
        %v365 = vlaneseq
        %v366 = vshrl.u32 %v365, 7
        %v367 = vsub.s32 0, %v366
        %v368 = vrot.slane %v363, %v367
        %v369 = vlaneseq
        %v370 = vshrl.u32 %v369, 7
        %v371 = vsub.s32 1, %v370
        %v372 = vrot.slane %v363, %v371
        %v375 = vmul.f32 %v361, %v368
        %v376 = vmul.f32 %v360, %v372
        %377 = vst [vmem:[#allocation2 + $0x10] sm:$0xff] %v375
        %378 = vst [vmem:[#allocation2 + $0x18] sm:$0xff] %v376
        %379 = vrot.lane.b32.xlu0 %v328, 15
        %v380 = vpop.permute.xlu0 %379
        %381 = vrot.lane.b32.xlu0 %v329, 15
        %v382 = vpop.permute.xlu0 %381
        %vm383 = vcmp.lt.s32.totalorder %v335, 15
        %v384 = vsel %vm383, %v380, %v382
        %v385 = vsel %vm383, %v382, %v380
        %s386 = scalar_lea.vmem %s0, 2
        %v387 = vld [vmem:[%s386] ss:$8 sm:$0x3]
        %v389 = vlaneseq
        %v390 = vshrl.u32 %v389, 7
        %v391 = vsub.s32 0, %v390
        %v392 = vrot.slane %v387, %v391
        %v393 = vlaneseq
        %v394 = vshrl.u32 %v393, 7
        %v395 = vsub.s32 1, %v394
        %v396 = vrot.slane %v387, %v395
        %v399 = vmul.f32 %v385, %v392
        %v400 = vmul.f32 %v384, %v396
        %401 = vst [vmem:[#allocation2 + $0x20] sm:$0xff] %v399
        %402 = vst [vmem:[#allocation2 + $0x28] sm:$0xff] %v400
        %403 = vrot.lane.b32.xlu0 %v328, 1
        %v404 = vpop.permute.xlu0 %403
        %405 = vrot.lane.b32.xlu0 %v329, 1
        %v406 = vpop.permute.xlu0 %405
        %vm407 = vcmp.lt.s32.totalorder %v335, 1
        %v408 = vsel %vm407, %v404, %v406
        %v409 = vsel %vm407, %v406, %v404
        %s410 = scalar_lea.vmem %s0, 3
        %v411 = vld [vmem:[%s410] ss:$8 sm:$0x3]
        %v413 = vlaneseq
        %v414 = vshrl.u32 %v413, 7
        %v415 = vsub.s32 0, %v414
        %v416 = vrot.slane %v411, %v415
        %v417 = vlaneseq
        %v418 = vshrl.u32 %v417, 7
        %v419 = vsub.s32 1, %v418
        %v420 = vrot.slane %v411, %v419
        %v423 = vmul.f32 %v409, %v416
        %v424 = vmul.f32 %v408, %v420
        %425 = vst [vmem:[#allocation2 + $0x30] sm:$0xff] %v423
        %426 = vst [vmem:[#allocation2 + $0x38] sm:$0xff] %v424
        %427 = vst [vmem:[#allocation2 + $0x40] sm:$0xff] %v328
        %428 = vst [vmem:[#allocation2 + $0x48] sm:$0xff] %v329
        %429 = vrot.lane.b32.xlu0 %v328, 127
        %v430 = vpop.permute.xlu0 %429
        %431 = vrot.lane.b32.xlu0 %v329, 127
        %v432 = vpop.permute.xlu0 %431
        %vm433 = vcmp.lt.s32.totalorder %v335, 127
        %v434 = vsel %vm433, %v430, %v432
        %v435 = vsel %vm433, %v432, %v430
        %s436 = scalar_lea.vmem %s0, 5
        %v437 = vld [vmem:[%s436] ss:$8 sm:$0x3]
        %v439 = vlaneseq
        %v440 = vshrl.u32 %v439, 7
        %v441 = vsub.s32 0, %v440
        %v442 = vrot.slane %v437, %v441
        %v443 = vlaneseq
        %v444 = vshrl.u32 %v443, 7
        %v445 = vsub.s32 1, %v444
        %v446 = vrot.slane %v437, %v445
        %v449 = vmul.f32 %v434, %v442
        %v450 = vmul.f32 %v435, %v446
        %451 = vst [vmem:[#allocation2 + $0x50] sm:$0xff] %v449
        %452 = vst [vmem:[#allocation2 + $0x58] sm:$0xff] %v450
        %453 = vrot.lane.b32.xlu0 %v328, 113
        %v454 = vpop.permute.xlu0 %453
        %455 = vrot.lane.b32.xlu0 %v329, 113
        %v456 = vpop.permute.xlu0 %455
        %vm457 = vcmp.lt.s32.totalorder %v335, 113
        %v458 = vsel %vm457, %v454, %v456
        %v459 = vsel %vm457, %v456, %v454
        %s460 = scalar_lea.vmem %s0, 6
        %v461 = vld [vmem:[%s460] ss:$8 sm:$0x3]
        %v463 = vlaneseq
        %v464 = vshrl.u32 %v463, 7
        %v465 = vsub.s32 0, %v464
        %v466 = vrot.slane %v461, %v465
        %v467 = vlaneseq
        %v468 = vshrl.u32 %v467, 7
        %v469 = vsub.s32 1, %v468
        %v470 = vrot.slane %v461, %v469
        %v473 = vmul.f32 %v458, %v466
        %v474 = vmul.f32 %v459, %v470
        %475 = vst [vmem:[#allocation2 + $0x60] sm:$0xff] %v473
        %476 = vst [vmem:[#allocation2 + $0x68] sm:$0xff] %v474
        %477 = vrot.lane.b32.xlu0 %v328, 112
        %v478 = vpop.permute.xlu0 %477
        %479 = vrot.lane.b32.xlu0 %v329, 112
        %v480 = vpop.permute.xlu0 %479
        %vm481 = vcmp.lt.s32.totalorder %v335, 112
        %v482 = vsel %vm481, %v478, %v480
        %v483 = vsel %vm481, %v480, %v478
        %s484 = scalar_lea.vmem %s0, 7
        %v485 = vld [vmem:[%s484] ss:$8 sm:$0x3]
        %v487 = vlaneseq
        %v488 = vshrl.u32 %v487, 7
        %v489 = vsub.s32 0, %v488
        %v490 = vrot.slane %v485, %v489
        %v491 = vlaneseq
        %v492 = vshrl.u32 %v491, 7
        %v493 = vsub.s32 1, %v492
        %v494 = vrot.slane %v485, %v493
        %v497 = vmul.f32 %v482, %v490
        %v498 = vmul.f32 %v483, %v494
        %499 = vst [vmem:[#allocation2 + $0x70] sm:$0xff] %v497
        %500 = vst [vmem:[#allocation2 + $0x78] sm:$0xff] %v498
        %501 = vrot.lane.b32.xlu0 %v328, 111
        %v502 = vpop.permute.xlu0 %501
        %503 = vrot.lane.b32.xlu0 %v329, 111
        %v504 = vpop.permute.xlu0 %503
        %vm505 = vcmp.lt.s32.totalorder %v335, 111
        %v506 = vsel %vm505, %v502, %v504
        %v507 = vsel %vm505, %v504, %v502
        %s508 = scalar_lea.vmem %s0, 16
        %v509 = vld [vmem:[%s508] ss:$8 sm:$0x3]
        %v511 = vlaneseq
        %v512 = vshrl.u32 %v511, 7
        %v513 = vsub.s32 0, %v512
        %v514 = vrot.slane %v509, %v513
        %v515 = vlaneseq
        %v516 = vshrl.u32 %v515, 7
        %v517 = vsub.s32 1, %v516
        %v518 = vrot.slane %v509, %v517
        %v521 = vmul.f32 %v506, %v514
        %v522 = vmul.f32 %v507, %v518
        %523 = vst [vmem:[#allocation2 + $0x80] sm:$0xff] %v521
        %524 = vst [vmem:[#allocation2 + $0x88] sm:$0xff] %v522
        %v525 = vld [vmem:[#allocation2] sm:$0xff]
        %v526 = vld [vmem:[#allocation2 + $0x8] sm:$0xff]
        %v527 = vld [vmem:[#allocation2 + $0x10] sm:$0xff]
        %v528 = vld [vmem:[#allocation2 + $0x18] sm:$0xff]
        %v529 = vld [vmem:[#allocation2 + $0x20] sm:$0xff]
        %v530 = vld [vmem:[#allocation2 + $0x28] sm:$0xff]
        %v531 = vld [vmem:[#allocation2 + $0x30] sm:$0xff]
        %v532 = vld [vmem:[#allocation2 + $0x38] sm:$0xff]
        %v533 = vld [vmem:[#allocation2 + $0x40] sm:$0xff]
        %v534 = vld [vmem:[#allocation2 + $0x48] sm:$0xff]
        %v535 = vld [vmem:[#allocation2 + $0x50] sm:$0xff]
        %v536 = vld [vmem:[#allocation2 + $0x58] sm:$0xff]
        %v537 = vld [vmem:[#allocation2 + $0x60] sm:$0xff]
        %v538 = vld [vmem:[#allocation2 + $0x68] sm:$0xff]
        %v539 = vld [vmem:[#allocation2 + $0x70] sm:$0xff]
        %v540 = vld [vmem:[#allocation2 + $0x78] sm:$0xff]
        %v541 = vld [vmem:[#allocation2 + $0x80] sm:$0xff]
        %v542 = vld [vmem:[#allocation2 + $0x88] sm:$0xff]
        %vm543 = vcmask 588800
        %v545 = vsel %vm543, %v322, 0
        %547 = vmatprep.subr.mxu0 %v526
        %548 = vmatpush1.msra.mxu0 %v525
        %549 = vmatprep.subr.mxu0 %v528
        %550 = vmatpush1.msra.mxu0 %v527
        %551 = vmatprep.subr.mxu0 %v530
        %552 = vmatpush1.msra.mxu0 %v529
        %553 = vmatprep.subr.mxu0 %v532
        %554 = vmatpush1.msra.mxu0 %v531
        %555 = vmatprep.subr.mxu0 %v534
        %556 = vmatpush1.msra.mxu0 %v533
        %557 = vmatprep.subr.mxu0 %v536
        %558 = vmatpush1.msra.mxu0 %v535
        %559 = vmatprep.subr.mxu0 %v538
        %560 = vmatpush1.msra.mxu0 %v537
        %561 = vmatprep.subr.mxu0 %v540
        %562 = vmatpush1.msra.mxu0 %v539
        %563 = vmatprep.subr.mxu0 %v542
        %564 = vmatpush1.msra.mxu0 %v541
        %565 = vmatprep.subr.mxu0 0.0
        %566 = vmatpush1.msra.mxu0 0.0
        %567 = vmatprep.subr.mxu0 0.0
        %568 = vmatpush1.msra.mxu0 0.0
        %569 = vmatprep.subr.mxu0 0.0
        %570 = vmatpush1.msra.mxu0 0.0
        %571 = vmatprep.subr.mxu0 0.0
        %572 = vmatpush1.msra.mxu0 0.0
        %573 = vmatprep.subr.mxu0 0.0
        %574 = vmatpush1.msra.mxu0 0.0
        %575 = vmatprep.subr.mxu0 0.0
        %576 = vmatpush1.msra.mxu0 0.0
        %577 = vmatprep.subr.mxu0 0.0
        %578 = vmatpush1.msra.mxu0 0.0
        %579 = vmatprep.subr.mxu0 0.0
        %580 = vmatpush1.msra.mxu0 0.0
        %581 = vmatprep.subr.mxu0 0.0
        %582 = vmatpush1.msra.mxu0 0.0
        %583 = vmatprep.subr.mxu0 0.0
        %584 = vmatpush1.msra.mxu0 0.0
        %585 = vmatprep.subr.mxu0 0.0
        %586 = vmatpush1.msra.mxu0 0.0
        %587 = vmatprep.subr.mxu0 0.0
        %588 = vmatpush1.msra.mxu0 0.0
        %589 = vmatprep.subr.mxu0 0.0
        %590 = vmatpush1.msra.mxu0 0.0
        %591 = vmatprep.subr.mxu0 0.0
        %592 = vmatpush1.msra.mxu0 0.0
        %593 = vmatprep.subr.mxu0 0.0
        %594 = vmatpush1.msra.mxu0 0.0
        %595 = vmatprep.subr.mxu0 0.0
        %596 = vmatpush1.msra.mxu0 0.0
        %597 = vmatprep.subr.mxu0 0.0
        %598 = vmatpush1.msra.mxu0 0.0
        %599 = vmatprep.subr.mxu0 0.0
        %600 = vmatpush1.msra.mxu0 0.0
        %601 = vmatprep.subr.mxu0 0.0
        %602 = vmatpush1.msra.mxu0 0.0
        %603 = vmatprep.subr.mxu0 0.0
        %604 = vmatpush1.msra.mxu0 0.0
        %605 = vmatprep.subr.mxu0 0.0
        %606 = vmatpush1.msra.mxu0 0.0
        %607 = vmatprep.subr.mxu0 0.0
        %608 = vmatpush1.msra.mxu0 0.0
        %609 = vmatprep.subr.mxu0 0.0
        %610 = vmatpush1.msra.mxu0 0.0
        %611 = vmatprep.mubr.f32.mxu0 0.0
        %612 = vmatmul.mubr.f32.gmra.mrb[0].mxu0 %v545
        %v613 = vpop.f32.mrb[0].mxu0
        %v614 = vadd.f32 0.0, %v613
        %v615 = vpop.f32.mrb[0].mxu0
        %v616 = vadd.f32 0.0, %v615
        %617 = vdwg.mxu0
        %v618 = vadd.f32 %v614, %v616
        %619 = vadd.xlane.f32.xlu0 %v618
        %v620 = vpop.xlane.xlu0 %619
        %v621 = vmul.f32 %v620, 0.00390625
        %v622 = vmul.f32 %v614, %v614
        %v623 = vmul.f32 %v616, %v616
        %v624 = vadd.f32 %v622, %v623
        %625 = vadd.xlane.f32.xlu0 %v624
        %v626 = vpop.xlane.xlu0 %625
        %v627 = vmul.f32 %v626, 0.00390625
        %v628 = vmul.f32 %v621, %v621
        %v629 = vsub.f32 %v627, %v628
        %v630 = vmax.f32 %v629, 0.0
        %v631 = vsub.f32 %v614, %v621
        %v632 = vsub.f32 %v616, %v621
        %v633 = vadd.f32 %v630, 1e-05
        %v634 = vrsqrt.pop %v633
        %v635 = vmul.f32 %v631, %v634
        %v636 = vmul.f32 %v632, %v634
        %638 = vset.pattern.permute.xlu0 0
        %639 = vperm.xlu0 %638, %v324
        %v640 = vpop.permute.xlu0 %639
        %v642 = vmul.f32 %v635, %v640
        %v643 = vmul.f32 %v636, %v640
        %645 = vset.pattern.permute.xlu0 0
        %646 = vperm.xlu0 %645, %v325
        %v647 = vpop.permute.xlu0 %646
        %v649 = vadd.f32 %v642, %v647
        %v650 = vadd.f32 %v643, %v647
        %vm651 = vcmp.gt.f32.partialorder %v649, 0.0
        %vm652 = vcmp.gt.f32.partialorder %v650, 0.0
        %v653 = vmul.f32 %v649, 0.01
        %v654 = vmul.f32 %v650, 0.01
        %v655 = vsel %vm651, %v649, %v653
        %v656 = vsel %vm652, %v650, %v654
        %657 = vrot.lane.b32.xlu0 %v655, 17
        %v658 = vpop.permute.xlu0 %657
        %659 = vrot.lane.b32.xlu0 %v656, 17
        %v660 = vpop.permute.xlu0 %659
        %v661 = vsel %vm336, %v658, %v660
        %v662 = vsel %vm336, %v660, %v658
        %v663 = vld [vmem:[%s0] ss:$8 sm:$0x3]
        %v665 = vlaneseq
        %v666 = vshrl.u32 %v665, 7
        %v667 = vsub.s32 0, %v666
        %v668 = vrot.slane %v663, %v667
        %v669 = vlaneseq
        %v670 = vshrl.u32 %v669, 7
        %v671 = vsub.s32 1, %v670
        %v672 = vrot.slane %v663, %v671
        %v675 = vmul.f32 %v662, %v668
        %v676 = vmul.f32 %v661, %v672
        %677 = vst [vmem:[#allocation2] sm:$0xff] %v675
        %678 = vst [vmem:[#allocation2 + $0x8] sm:$0xff] %v676
        %679 = vrot.lane.b32.xlu0 %v655, 16
        %v680 = vpop.permute.xlu0 %679
        %681 = vrot.lane.b32.xlu0 %v656, 16
        %v682 = vpop.permute.xlu0 %681
        %v683 = vsel %vm359, %v680, %v682
        %v684 = vsel %vm359, %v682, %v680
        %v685 = vld [vmem:[%s362] ss:$8 sm:$0x3]
        %v687 = vlaneseq
        %v688 = vshrl.u32 %v687, 7
        %v689 = vsub.s32 0, %v688
        %v690 = vrot.slane %v685, %v689
        %v691 = vlaneseq
        %v692 = vshrl.u32 %v691, 7
        %v693 = vsub.s32 1, %v692
        %v694 = vrot.slane %v685, %v693
        %v697 = vmul.f32 %v684, %v690
        %v698 = vmul.f32 %v683, %v694
        %699 = vst [vmem:[#allocation2 + $0x10] sm:$0xff] %v697
        %700 = vst [vmem:[#allocation2 + $0x18] sm:$0xff] %v698
        %701 = vrot.lane.b32.xlu0 %v655, 15
        %v702 = vpop.permute.xlu0 %701
        %703 = vrot.lane.b32.xlu0 %v656, 15
        %v704 = vpop.permute.xlu0 %703
        %v705 = vsel %vm383, %v702, %v704
        %v706 = vsel %vm383, %v704, %v702
        %v707 = vld [vmem:[%s386] ss:$8 sm:$0x3]
        %v709 = vlaneseq
        %v710 = vshrl.u32 %v709, 7
        %v711 = vsub.s32 0, %v710
        %v712 = vrot.slane %v707, %v711
        %v713 = vlaneseq
        %v714 = vshrl.u32 %v713, 7
        %v715 = vsub.s32 1, %v714
        %v716 = vrot.slane %v707, %v715
        %v719 = vmul.f32 %v706, %v712
        %v720 = vmul.f32 %v705, %v716
        %721 = vst [vmem:[#allocation2 + $0x20] sm:$0xff] %v719
        %722 = vst [vmem:[#allocation2 + $0x28] sm:$0xff] %v720
        %723 = vrot.lane.b32.xlu0 %v655, 1
        %v724 = vpop.permute.xlu0 %723
        %725 = vrot.lane.b32.xlu0 %v656, 1
        %v726 = vpop.permute.xlu0 %725
        %v727 = vsel %vm407, %v724, %v726
        %v728 = vsel %vm407, %v726, %v724
        %v729 = vld [vmem:[%s410] ss:$8 sm:$0x3]
        %v731 = vlaneseq
        %v732 = vshrl.u32 %v731, 7
        %v733 = vsub.s32 0, %v732
        %v734 = vrot.slane %v729, %v733
        %v735 = vlaneseq
        %v736 = vshrl.u32 %v735, 7
        %v737 = vsub.s32 1, %v736
        %v738 = vrot.slane %v729, %v737
        %v741 = vmul.f32 %v728, %v734
        %v742 = vmul.f32 %v727, %v738
        %743 = vst [vmem:[#allocation2 + $0x30] sm:$0xff] %v741
        %744 = vst [vmem:[#allocation2 + $0x38] sm:$0xff] %v742
        %745 = vst [vmem:[#allocation2 + $0x40] sm:$0xff] %v655
        %746 = vst [vmem:[#allocation2 + $0x48] sm:$0xff] %v656
        %747 = vrot.lane.b32.xlu0 %v655, 127
        %v748 = vpop.permute.xlu0 %747
        %749 = vrot.lane.b32.xlu0 %v656, 127
        %v750 = vpop.permute.xlu0 %749
        %v751 = vsel %vm433, %v748, %v750
        %v752 = vsel %vm433, %v750, %v748
        %v753 = vld [vmem:[%s436] ss:$8 sm:$0x3]
        %v755 = vlaneseq
        %v756 = vshrl.u32 %v755, 7
        %v757 = vsub.s32 0, %v756
        %v758 = vrot.slane %v753, %v757
        %v759 = vlaneseq
        %v760 = vshrl.u32 %v759, 7
        %v761 = vsub.s32 1, %v760
        %v762 = vrot.slane %v753, %v761
        %v765 = vmul.f32 %v751, %v758
        %v766 = vmul.f32 %v752, %v762
        %767 = vst [vmem:[#allocation2 + $0x50] sm:$0xff] %v765
        %768 = vst [vmem:[#allocation2 + $0x58] sm:$0xff] %v766
        %769 = vrot.lane.b32.xlu0 %v655, 113
        %v770 = vpop.permute.xlu0 %769
        %771 = vrot.lane.b32.xlu0 %v656, 113
        %v772 = vpop.permute.xlu0 %771
        %v773 = vsel %vm457, %v770, %v772
        %v774 = vsel %vm457, %v772, %v770
        %v775 = vld [vmem:[%s460] ss:$8 sm:$0x3]
        %v777 = vlaneseq
        %v778 = vshrl.u32 %v777, 7
        %v779 = vsub.s32 0, %v778
        %v780 = vrot.slane %v775, %v779
        %v781 = vlaneseq
        %v782 = vshrl.u32 %v781, 7
        %v783 = vsub.s32 1, %v782
        %v784 = vrot.slane %v775, %v783
        %v787 = vmul.f32 %v773, %v780
        %v788 = vmul.f32 %v774, %v784
        %789 = vst [vmem:[#allocation2 + $0x60] sm:$0xff] %v787
        %790 = vst [vmem:[#allocation2 + $0x68] sm:$0xff] %v788
        %791 = vrot.lane.b32.xlu0 %v655, 112
        %v792 = vpop.permute.xlu0 %791
        %793 = vrot.lane.b32.xlu0 %v656, 112
        %v794 = vpop.permute.xlu0 %793
        %v795 = vsel %vm481, %v792, %v794
        %v796 = vsel %vm481, %v794, %v792
        %v797 = vld [vmem:[%s484] ss:$8 sm:$0x3]
        %v799 = vlaneseq
        %v800 = vshrl.u32 %v799, 7
        %v801 = vsub.s32 0, %v800
        %v802 = vrot.slane %v797, %v801
        %v803 = vlaneseq
        %v804 = vshrl.u32 %v803, 7
        %v805 = vsub.s32 1, %v804
        %v806 = vrot.slane %v797, %v805
        %v809 = vmul.f32 %v795, %v802
        %v810 = vmul.f32 %v796, %v806
        %811 = vst [vmem:[#allocation2 + $0x70] sm:$0xff] %v809
        %812 = vst [vmem:[#allocation2 + $0x78] sm:$0xff] %v810
        %813 = vrot.lane.b32.xlu0 %v655, 111
        %v814 = vpop.permute.xlu0 %813
        %815 = vrot.lane.b32.xlu0 %v656, 111
        %v816 = vpop.permute.xlu0 %815
        %v817 = vsel %vm505, %v814, %v816
        %v818 = vsel %vm505, %v816, %v814
        %v819 = vld [vmem:[%s508] ss:$8 sm:$0x3]
        %v821 = vlaneseq
        %v822 = vshrl.u32 %v821, 7
        %v823 = vsub.s32 0, %v822
        %v824 = vrot.slane %v819, %v823
        %v825 = vlaneseq
        %v826 = vshrl.u32 %v825, 7
        %v827 = vsub.s32 1, %v826
        %v828 = vrot.slane %v819, %v827
        %v831 = vmul.f32 %v817, %v824
        %v832 = vmul.f32 %v818, %v828
        %833 = vst [vmem:[#allocation2 + $0x80] sm:$0xff] %v831
        %834 = vst [vmem:[#allocation2 + $0x88] sm:$0xff] %v832
        %v835 = vld [vmem:[#allocation2] sm:$0xff]
        %v836 = vld [vmem:[#allocation2 + $0x8] sm:$0xff]
        %v837 = vld [vmem:[#allocation2 + $0x10] sm:$0xff]
        %v838 = vld [vmem:[#allocation2 + $0x18] sm:$0xff]
        %v839 = vld [vmem:[#allocation2 + $0x20] sm:$0xff]
        %v840 = vld [vmem:[#allocation2 + $0x28] sm:$0xff]
        %v841 = vld [vmem:[#allocation2 + $0x30] sm:$0xff]
        %v842 = vld [vmem:[#allocation2 + $0x38] sm:$0xff]
        %v843 = vld [vmem:[#allocation2 + $0x40] sm:$0xff]
        %v844 = vld [vmem:[#allocation2 + $0x48] sm:$0xff]
        %v845 = vld [vmem:[#allocation2 + $0x50] sm:$0xff]
        %v846 = vld [vmem:[#allocation2 + $0x58] sm:$0xff]
        %v847 = vld [vmem:[#allocation2 + $0x60] sm:$0xff]
        %v848 = vld [vmem:[#allocation2 + $0x68] sm:$0xff]
        %v849 = vld [vmem:[#allocation2 + $0x70] sm:$0xff]
        %v850 = vld [vmem:[#allocation2 + $0x78] sm:$0xff]
        %v851 = vld [vmem:[#allocation2 + $0x80] sm:$0xff]
        %v852 = vld [vmem:[#allocation2 + $0x88] sm:$0xff]
        %v854 = vsel %vm543, %v323, 0
        %856 = vmatprep.subr.mxu0 %v836
        %857 = vmatpush1.msra.mxu0 %v835
        %858 = vmatprep.subr.mxu0 %v838
        %859 = vmatpush1.msra.mxu0 %v837
        %860 = vmatprep.subr.mxu0 %v840
        %861 = vmatpush1.msra.mxu0 %v839
        %862 = vmatprep.subr.mxu0 %v842
        %863 = vmatpush1.msra.mxu0 %v841
        %864 = vmatprep.subr.mxu0 %v844
        %865 = vmatpush1.msra.mxu0 %v843
        %866 = vmatprep.subr.mxu0 %v846
        %867 = vmatpush1.msra.mxu0 %v845
        %868 = vmatprep.subr.mxu0 %v848
        %869 = vmatpush1.msra.mxu0 %v847
        %870 = vmatprep.subr.mxu0 %v850
        %871 = vmatpush1.msra.mxu0 %v849
        %872 = vmatprep.subr.mxu0 %v852
        %873 = vmatpush1.msra.mxu0 %v851
        %874 = vmatprep.subr.mxu0 0.0
        %875 = vmatpush1.msra.mxu0 0.0
        %876 = vmatprep.subr.mxu0 0.0
        %877 = vmatpush1.msra.mxu0 0.0
        %878 = vmatprep.subr.mxu0 0.0
        %879 = vmatpush1.msra.mxu0 0.0
        %880 = vmatprep.subr.mxu0 0.0
        %881 = vmatpush1.msra.mxu0 0.0
        %882 = vmatprep.subr.mxu0 0.0
        %883 = vmatpush1.msra.mxu0 0.0
        %884 = vmatprep.subr.mxu0 0.0
        %885 = vmatpush1.msra.mxu0 0.0
        %886 = vmatprep.subr.mxu0 0.0
        %887 = vmatpush1.msra.mxu0 0.0
        %888 = vmatprep.subr.mxu0 0.0
        %889 = vmatpush1.msra.mxu0 0.0
        %890 = vmatprep.subr.mxu0 0.0
        %891 = vmatpush1.msra.mxu0 0.0
        %892 = vmatprep.subr.mxu0 0.0
        %893 = vmatpush1.msra.mxu0 0.0
        %894 = vmatprep.subr.mxu0 0.0
        %895 = vmatpush1.msra.mxu0 0.0
        %896 = vmatprep.subr.mxu0 0.0
        %897 = vmatpush1.msra.mxu0 0.0
        %898 = vmatprep.subr.mxu0 0.0
        %899 = vmatpush1.msra.mxu0 0.0
        %900 = vmatprep.subr.mxu0 0.0
        %901 = vmatpush1.msra.mxu0 0.0
        %902 = vmatprep.subr.mxu0 0.0
        %903 = vmatpush1.msra.mxu0 0.0
        %904 = vmatprep.subr.mxu0 0.0
        %905 = vmatpush1.msra.mxu0 0.0
        %906 = vmatprep.subr.mxu0 0.0
        %907 = vmatpush1.msra.mxu0 0.0
        %908 = vmatprep.subr.mxu0 0.0
        %909 = vmatpush1.msra.mxu0 0.0
        %910 = vmatprep.subr.mxu0 0.0
        %911 = vmatpush1.msra.mxu0 0.0
        %912 = vmatprep.subr.mxu0 0.0
        %913 = vmatpush1.msra.mxu0 0.0
        %914 = vmatprep.subr.mxu0 0.0
        %915 = vmatpush1.msra.mxu0 0.0
        %916 = vmatprep.subr.mxu0 0.0
        %917 = vmatpush1.msra.mxu0 0.0
        %918 = vmatprep.subr.mxu0 0.0
        %919 = vmatpush1.msra.mxu0 0.0
        %920 = vmatprep.mubr.f32.mxu0 0.0
        %921 = vmatmul.mubr.f32.gmra.mrb[0].mxu0 %v854
        %v922 = vpop.f32.mrb[0].mxu0
        %v923 = vadd.f32 0.0, %v922
        %v924 = vpop.f32.mrb[0].mxu0
        %v925 = vadd.f32 0.0, %v924
        %926 = vdwg.mxu0
        %v927 = vadd.f32 %v923, %v925
        %928 = vadd.xlane.f32.xlu0 %v927
        %v929 = vpop.xlane.xlu0 %928
        %v930 = vmul.f32 %v929, 0.00390625
        %v931 = vmul.f32 %v923, %v923
        %v932 = vmul.f32 %v925, %v925
        %v933 = vadd.f32 %v931, %v932
        %934 = vadd.xlane.f32.xlu0 %v933
        %v935 = vpop.xlane.xlu0 %934
        %v936 = vmul.f32 %v935, 0.00390625
        %v937 = vmul.f32 %v930, %v930
        %v938 = vsub.f32 %v936, %v937
        %v939 = vmax.f32 %v938, 0.0
        %v940 = vsub.f32 %v923, %v930
        %v941 = vsub.f32 %v925, %v930
        %v942 = vadd.f32 %v939, 1e-05
        %v943 = vrsqrt.pop %v942
        %v944 = vmul.f32 %v940, %v943
        %v945 = vmul.f32 %v941, %v943
        %947 = vset.pattern.permute.xlu0 0
        %948 = vperm.xlu0 %947, %v326
        %v949 = vpop.permute.xlu0 %948
        %v951 = vmul.f32 %v944, %v949
        %v952 = vmul.f32 %v945, %v949
        %954 = vset.pattern.permute.xlu0 0
        %955 = vperm.xlu0 %954, %v327
        %v956 = vpop.permute.xlu0 %955
        %v958 = vadd.f32 %v951, %v956
        %v959 = vadd.f32 %v952, %v956
        %v960 = vadd.f32 %v328, %v958
        %v961 = vadd.f32 %v329, %v959
        %962 = vst [vmem:[%s321] sm:$0xff] %v960
        %963 = vst [vmem:[%s321 + $0x8] sm:$0xff] %v961
        %s964 = sand.u32 %s206, 1
        %s965 = scalar_lea.sflag [#allocation5], %s964
        %s966 = sand.u32 %s206, 1
        %s967 = smul.addr %s966, 16
        %s968 = scalar_lea.vmem [#allocation6], %s967
        // Predicated region
        $region57: #{tpu_custom_call.1} parent=51 // pred_check
          %p969 = pneg %p216
        $region58: #{tpu_custom_call.1} parent=51 // pred_check_branch
          %971 = sbr.rel (%p969) target = $region60
        $region59: #{tpu_custom_call.1} parent=51 // pred_region
          %s973 = ssub.s32 256, 256
          %974 = vsyncadd %s965, %s973
          %s975 = smul.addr %s25, 2
          %s976 = smul.addr %s975, 128
          %s977 = scalar_lea.hbm %s8, %s976
          %s979 = sshll.u32 %s968, 4
          %s980 = int_to_ptr.vmem [resolvable:$true] %s979
          %982 = dma.vmem_to_hbm [thread:$0]  %s980, 256, %s977, %s965
        $region60: #{tpu_custom_call.1} parent=51 // pred_fallthru
          _
      $region52: #{tpu_custom_call.1} parent=5 // pred_fallthru
        _
      %p983 = scmp.le.s32.totalorder 2, %s20
      // Predicated region
      $region61: #{tpu_custom_call.1} parent=5 // pred_check
        %p984 = pneg %p983
      $region62: #{tpu_custom_call.1} parent=5 // pred_check_branch
        %986 = sbr.rel (%p984) target = $region64
      $region63: #{tpu_custom_call.1} parent=5 // pred_region
        %s987 = ssub.s32 %s20, 2
        // Predicated region
        $region65: #{tpu_custom_call.1} parent=63 // pred_check
          %p988 = pneg %p222
        $region66: #{tpu_custom_call.1} parent=63 // pred_check_branch
          %990 = sbr.rel (%p988) target = $region68
        $region67: #{tpu_custom_call.1} parent=63 // pred_region
          %s991 = sand.u32 %s207, 1
          %s992 = scalar_lea.sflag [#allocation5], %s991
          %s993 = sand.u32 %s207, 1
          %s994 = smul.addr %s993, 16
          %s995 = scalar_lea.vmem [#allocation6], %s994
          %996 = dma.done %s992, 256
        $region68: #{tpu_custom_call.1} parent=63 // pred_fallthru
          _
      $region64: #{tpu_custom_call.1} parent=5 // pred_fallthru
        _
    $region6: #{tpu_custom_call.1} parent=1 // loop_footer
      %s24 = sadd.s32 1, %s20
    $region7: #{tpu_custom_call.1} parent=1 // loop_footer_branch
      %19 = sbr.rel target = $region3
    $region8: #{tpu_custom_call.1} parent=1 // loop_exit
      _
    %997 = vsyncpa [#allocation4], 1
    %s998 = scalar_lea.sflag [#allocation4], 1
    %999 = vsyncpa %s998, 1
    %1000 = vsyncpa [#allocation5], 1
    %s1001 = scalar_lea.sflag [#allocation5], 1
    %1002 = vsyncpa %s1001, 1

</llo_original>
